<compile_context>
chip_gen: v7x
topology: tpu7x:2x2x1
jax: 0.10.0
libtpu: 0.0.40
codegen_flags: <defaults>
</compile_context>

<pallas_src>
import jax
import jax.numpy as jnp
from jax.experimental import pallas as pl
from jax.experimental.pallas import tpu as pltpu

D_MODEL = 32
NHEAD = 4
DIM_FF = 64
HEAD_DIM = D_MODEL // NHEAD
LN_EPS = 1e-5


def encoder_layer_kernel(x_ref, wqkv_ref, wo_ref, w1_ref, w2_ref,
                         prow_ref, mask_ref, hmask_ref, o_ref):
    N, D = x_ref.shape                      # (B*S, D_MODEL)
    x = x_ref[...].astype(jnp.float32)

    # Packed 1-D parameters: one (8, 128) slab, sublane slices (lane 0 aligned).
    prow = prow_ref[...]
    bqkv = prow[0:1, 0:3 * D]               # (1, 3D), scale already folded into Q part
    bo = prow[1:2, 0:D]
    b1 = prow[2:3, 0:DIM_FF]
    b2 = prow[3:4, 0:D]
    gamma = prow[4:5, 0:D]
    beta = prow[5:6, 0:D]

    def layer_norm(v):
        mu = jnp.mean(v, axis=-1, keepdims=True)
        var = jnp.mean(jnp.square(v - mu), axis=-1, keepdims=True)
        return (v - mu) * jax.lax.rsqrt(var + LN_EPS) * gamma + beta

    # 1) shared pre-norm
    src = layer_norm(x)                     # (N, D)

    # 2) multi-head self-attention; fused QKV projection (scale folded into Wq/bq).
    qkv = jnp.dot(src, wqkv_ref[...], preferred_element_type=jnp.float32) + bqkv  # (N, 3D)
    q = qkv[:, 0:D]
    k = qkv[:, D:2 * D]
    v = qkv[:, 2 * D:3 * D]

    # Per-head lane masks (precomputed). Stack masked K/V per head along sublanes.
    hmask = hmask_ref[...]                  # (NHEAD, D)
    khat = jnp.concatenate([k * hmask[h:h + 1, :] for h in range(NHEAD)], axis=0)  # (4N, D)
    vhat = jnp.concatenate([v * hmask[h:h + 1, :] for h in range(NHEAD)], axis=0)  # (4N, D)

    # One wide score matmul: segment h of the columns holds head h's (N, N) scores.
    # Masked K makes masking Q unnecessary; mask_ref is the per-head-tiled, block-
    # diagonal (cross-batch) additive mask.
    scores = jnp.einsum('nd,md->nm', q, khat,
                        preferred_element_type=jnp.float32) + mask_ref[...]        # (N, 4N)

    # Per-head softmax on 16-lane segments (exact divide; EUP/VPU are idle anyway).
    probs = []
    for h in range(NHEAD):
        s_h = scores[:, h * N:(h + 1) * N]
        s_h = s_h - jnp.max(s_h, axis=-1, keepdims=True)
        p_h = jnp.exp(s_h)
        probs.append(p_h / jnp.sum(p_h, axis=-1, keepdims=True))
    p_all = jnp.concatenate(probs, axis=-1)                                         # (N, 4N)

    # Second wide matmul: masked V places each head's output in its own columns.
    ctx = jnp.dot(p_all, vhat, preferred_element_type=jnp.float32)                  # (N, D)
    attn_out = jnp.dot(ctx, wo_ref[...], preferred_element_type=jnp.float32) + bo
    # TODO(synk): attention-weight dropout and the two post-norm dropouts are identity (eval mode).

    # 3) add & norm
    add1 = layer_norm(src + attn_out)

    # 4) feed-forward with squared ReLU
    hdn = jnp.dot(add1, w1_ref[...], preferred_element_type=jnp.float32) + b1
    hdn = jnp.square(jnp.maximum(hdn, jnp.float32(0.0)))
    ff = jnp.dot(hdn, w2_ref[...], preferred_element_type=jnp.float32) + b2

    # 5) add & norm
    out = layer_norm(add1 + ff)
    o_ref[...] = out.astype(o_ref.dtype)


def transformer_encoder_layer(x, params):
    B, S, D = x.shape
    N = B * S
    scale = 1.0 / (HEAD_DIM ** 0.5)

    # Fused, pre-transposed QKV weight with the attention scale folded into Q columns.
    col_scale = jnp.concatenate([jnp.full((D,), scale, jnp.float32),
                                 jnp.ones((2 * D,), jnp.float32)])
    wqkv_t = params['in_w'].T * col_scale                      # (D, 3D)
    bqkv_vec = jnp.concatenate([params['in_b'][:D] * scale, params['in_b'][D:]])  # (3D,)

    wo_t = params['out_w'].T                                   # (D, D)
    w1_t = params['w1'].T                                      # (D, FF)
    w2_t = params['w2'].T                                      # (FF, D)

    # Pack every 1-D parameter into one (8, 128) f32 slab (exactly one vreg tile).
    prow = jnp.zeros((8, 128), jnp.float32)
    prow = prow.at[0, :3 * D].set(bqkv_vec)
    prow = prow.at[1, :D].set(params['out_b'])
    prow = prow.at[2, :DIM_FF].set(params['b1'])
    prow = prow.at[3, :D].set(params['b2'])
    prow = prow.at[4, :D].set(params['gamma'])
    prow = prow.at[5, :D].set(params['beta'])

    # Block-diagonal batch mask, tiled across the 4 head segments: (N, NHEAD*N).
    row_batch = jnp.arange(N)[:, None] // S
    key_batch = ((jnp.arange(NHEAD * N) % N) // S)[None, :]
    mask_all = jnp.where(row_batch == key_batch,
                         jnp.float32(0.0), jnp.float32(-1e30))

    # Per-head lane masks over the D_MODEL columns: (NHEAD, D).
    hmasks = (jnp.arange(D)[None, :] // HEAD_DIM
              == jnp.arange(NHEAD)[:, None]).astype(jnp.float32)

    x2 = x.reshape(N, D)                                       # leading-dim merge in wrapper

    inputs = (x2, wqkv_t, wo_t, w1_t, w2_t, prow, mask_all, hmasks)
    vmem_spec = pl.BlockSpec(memory_space=pltpu.MemorySpace.VMEM)

    out = pl.pallas_call(
        encoder_layer_kernel,
        out_shape=jax.ShapeDtypeStruct((N, D), x.dtype),
        in_specs=[vmem_spec] * len(inputs),                    # whole arrays, no grid,
        out_specs=vmem_spec,                                   # no pipeline machinery
    )(*inputs)
    return out.reshape(B, S, D)


def reference(x, p):
    # Pure-JAX reference of the same forward pass for a correctness check.
    def ln(v):
        mu = v.mean(-1, keepdims=True)
        var = jnp.square(v - mu).mean(-1, keepdims=True)
        return (v - mu) / jnp.sqrt(var + LN_EPS) * p['gamma'] + p['beta']

    B, S, D = x.shape
    src = ln(x)
    qkv = src @ p['in_w'].T + p['in_b']
    q, k, v = jnp.split(qkv, 3, axis=-1)

    def heads(t):
        return t.reshape(B, S, NHEAD, HEAD_DIM).transpose(0, 2, 1, 3)

    q, k, v = heads(q), heads(k), heads(v)
    scores = (q / HEAD_DIM ** 0.5) @ k.transpose(0, 1, 3, 2)
    attn = jax.nn.softmax(scores, axis=-1)
    o = (attn @ v).transpose(0, 2, 1, 3).reshape(B, S, D)
    attn_out = o @ p['out_w'].T + p['out_b']
    add1 = ln(src + attn_out)
    h = jnp.square(jax.nn.relu(add1 @ p['w1'].T + p['b1']))
    ff = h @ p['w2'].T + p['b2']
    return ln(add1 + ff)


if __name__ == "__main__":
    B, S = 2, 8
    key = jax.random.PRNGKey(0)
    ks = jax.random.split(key, 8)

    params = {
        'in_w':  0.1 * jax.random.normal(ks[0], (3 * D_MODEL, D_MODEL), jnp.float32),
        'in_b':  0.01 * jax.random.normal(ks[7], (3 * D_MODEL,), jnp.float32),
        'out_w': 0.1 * jax.random.normal(ks[1], (D_MODEL, D_MODEL), jnp.float32),
        'out_b': jnp.zeros((D_MODEL,), jnp.float32),
        'w1':    0.1 * jax.random.normal(ks[2], (DIM_FF, D_MODEL), jnp.float32),
        'b1':    0.01 * jax.random.normal(ks[3], (DIM_FF,), jnp.float32),
        'w2':    0.1 * jax.random.normal(ks[4], (D_MODEL, DIM_FF), jnp.float32),
        'b2':    0.01 * jax.random.normal(ks[5], (D_MODEL,), jnp.float32),
        'gamma': jnp.ones((D_MODEL,), jnp.float32),
        'beta':  jnp.zeros((D_MODEL,), jnp.float32),
    }
    x = jax.random.normal(ks[6], (B, S, D_MODEL), jnp.float32)

    fwd = jax.jit(transformer_encoder_layer)
    out = jax.block_until_ready(fwd(x, params))

    ref = jax.block_until_ready(reference(x, params))
    assert out.shape == (B, S, D_MODEL)
    err = float(jnp.max(jnp.abs(out - ref)))
    assert jnp.allclose(out, ref, atol=1e-4, rtol=1e-4), err
    print("KERNEL_OK")
</pallas_src>

<mosaic_0001>
module attributes {stable_mosaic.version = 11 : i64} {
  func.func @encoder_layer_kernel(%arg0: memref<16x32xf32, #tpu.memory_space<vmem>>, %arg1: memref<32x96xf32, #tpu.memory_space<vmem>>, %arg2: memref<32x32xf32, #tpu.memory_space<vmem>>, %arg3: memref<32x64xf32, #tpu.memory_space<vmem>>, %arg4: memref<64x32xf32, #tpu.memory_space<vmem>>, %arg5: memref<8x128xf32, #tpu.memory_space<vmem>>, %arg6: memref<16x64xf32, #tpu.memory_space<vmem>>, %arg7: memref<4x32xf32, #tpu.memory_space<vmem>>, %arg8: memref<16x32xf32, #tpu.memory_space<vmem>>) attributes {dimension_semantics = [], scalar_prefetch = 0 : i64, scratch_operands = 0 : i64, tpu.core_type = #tpu.core_type<tc>} {
    %c0 = arith.constant 0 : index
    %c0_0 = arith.constant 0 : index
    %0 = vector.load %arg0[%c0, %c0_0] : memref<16x32xf32, #tpu.memory_space<vmem>>, vector<16x32xf32>
    %c0_1 = arith.constant 0 : index
    %c0_2 = arith.constant 0 : index
    %1 = vector.load %arg5[%c0_1, %c0_2] : memref<8x128xf32, #tpu.memory_space<vmem>>, vector<8x128xf32>
    %2 = vector.extract_strided_slice %1 {offsets = [0, 0], sizes = [1, 96], strides = [1, 1]} : vector<8x128xf32> to vector<1x96xf32>
    %3 = vector.extract_strided_slice %1 {offsets = [1, 0], sizes = [1, 32], strides = [1, 1]} : vector<8x128xf32> to vector<1x32xf32>
    %4 = vector.extract_strided_slice %1 {offsets = [2, 0], sizes = [1, 64], strides = [1, 1]} : vector<8x128xf32> to vector<1x64xf32>
    %5 = vector.extract_strided_slice %1 {offsets = [3, 0], sizes = [1, 32], strides = [1, 1]} : vector<8x128xf32> to vector<1x32xf32>
    %6 = vector.extract_strided_slice %1 {offsets = [4, 0], sizes = [1, 32], strides = [1, 1]} : vector<8x128xf32> to vector<1x32xf32>
    %7 = vector.extract_strided_slice %1 {offsets = [5, 0], sizes = [1, 32], strides = [1, 1]} : vector<8x128xf32> to vector<1x32xf32>
    %cst = arith.constant dense<0.000000e+00> : vector<16xf32>
    %8 = vector.multi_reduction <add>, %0, %cst [1] : vector<16x32xf32> to vector<16xf32>
    %9 = vector.shape_cast %8 : vector<16xf32> to vector<16x1xf32>
    %cst_3 = arith.constant 3.200000e+01 : f32
    %10 = vector.broadcast %cst_3 : f32 to vector<16x1xf32>
    %11 = arith.divf %9, %10 : vector<16x1xf32>
    %12 = vector.broadcast %11 : vector<16x1xf32> to vector<16x32xf32>
    %13 = arith.subf %0, %12 : vector<16x32xf32>
    %14 = arith.mulf %13, %13 : vector<16x32xf32>
    %cst_4 = arith.constant dense<0.000000e+00> : vector<16xf32>
    %15 = vector.multi_reduction <add>, %14, %cst_4 [1] : vector<16x32xf32> to vector<16xf32>
    %16 = vector.shape_cast %15 : vector<16xf32> to vector<16x1xf32>
    %cst_5 = arith.constant 3.200000e+01 : f32
    %17 = vector.broadcast %cst_5 : f32 to vector<16x1xf32>
    %18 = arith.divf %16, %17 : vector<16x1xf32>
    %19 = vector.broadcast %11 : vector<16x1xf32> to vector<16x32xf32>
    %20 = arith.subf %0, %19 : vector<16x32xf32>
    %cst_6 = arith.constant 9.99999974E-6 : f32
    %21 = vector.broadcast %cst_6 : f32 to vector<16x1xf32>
    %22 = arith.addf %18, %21 : vector<16x1xf32>
    %23 = math.rsqrt %22 : vector<16x1xf32>
    %24 = vector.broadcast %23 : vector<16x1xf32> to vector<16x32xf32>
    %25 = arith.mulf %20, %24 : vector<16x32xf32>
    %26 = vector.broadcast %6 : vector<1x32xf32> to vector<16x32xf32>
    %27 = arith.mulf %25, %26 : vector<16x32xf32>
    %28 = vector.broadcast %7 : vector<1x32xf32> to vector<16x32xf32>
    %29 = arith.addf %27, %28 : vector<16x32xf32>
    %c0_7 = arith.constant 0 : index
    %c0_8 = arith.constant 0 : index
    %30 = vector.load %arg1[%c0_7, %c0_8] : memref<32x96xf32, #tpu.memory_space<vmem>>, vector<32x96xf32>
    %cst_9 = arith.constant dense<0.000000e+00> : vector<16x96xf32>
    %31 = tpu.matmul %29, %30, %cst_9 {dimension_numbers = #tpu.dot_dimension_numbers<[1], [0], [0], [1], [0, 0, 1, 1], [], []>} : vector<16x32xf32>, vector<32x96xf32>, vector<16x96xf32> -> vector<16x96xf32>
    %32 = vector.broadcast %2 : vector<1x96xf32> to vector<16x96xf32>
    %33 = arith.addf %31, %32 : vector<16x96xf32>
    %34 = vector.extract_strided_slice %33 {offsets = [0, 0], sizes = [16, 32], strides = [1, 1]} : vector<16x96xf32> to vector<16x32xf32>
    %35 = vector.extract_strided_slice %33 {offsets = [0, 32], sizes = [16, 32], strides = [1, 1]} : vector<16x96xf32> to vector<16x32xf32>
    %36 = vector.extract_strided_slice %33 {offsets = [0, 64], sizes = [16, 32], strides = [1, 1]} : vector<16x96xf32> to vector<16x32xf32>
    %c0_10 = arith.constant 0 : index
    %c0_11 = arith.constant 0 : index
    %37 = vector.load %arg7[%c0_10, %c0_11] : memref<4x32xf32, #tpu.memory_space<vmem>>, vector<4x32xf32>
    %38 = vector.extract_strided_slice %37 {offsets = [0, 0], sizes = [1, 32], strides = [1, 1]} : vector<4x32xf32> to vector<1x32xf32>
    %39 = vector.broadcast %38 : vector<1x32xf32> to vector<16x32xf32>
    %40 = arith.mulf %35, %39 : vector<16x32xf32>
    %41 = vector.extract_strided_slice %37 {offsets = [1, 0], sizes = [1, 32], strides = [1, 1]} : vector<4x32xf32> to vector<1x32xf32>
    %42 = vector.broadcast %41 : vector<1x32xf32> to vector<16x32xf32>
    %43 = arith.mulf %35, %42 : vector<16x32xf32>
    %44 = vector.extract_strided_slice %37 {offsets = [2, 0], sizes = [1, 32], strides = [1, 1]} : vector<4x32xf32> to vector<1x32xf32>
    %45 = vector.broadcast %44 : vector<1x32xf32> to vector<16x32xf32>
    %46 = arith.mulf %35, %45 : vector<16x32xf32>
    %47 = vector.extract_strided_slice %37 {offsets = [3, 0], sizes = [1, 32], strides = [1, 1]} : vector<4x32xf32> to vector<1x32xf32>
    %48 = vector.broadcast %47 : vector<1x32xf32> to vector<16x32xf32>
    %49 = arith.mulf %35, %48 : vector<16x32xf32>
    %50 = tpu.concatenate %40, %43, %46, %49 in 0 : vector<16x32xf32>, vector<16x32xf32>, vector<16x32xf32>, vector<16x32xf32> -> vector<64x32xf32>
    %51 = vector.extract_strided_slice %37 {offsets = [0, 0], sizes = [1, 32], strides = [1, 1]} : vector<4x32xf32> to vector<1x32xf32>
    %52 = vector.broadcast %51 : vector<1x32xf32> to vector<16x32xf32>
    %53 = arith.mulf %36, %52 : vector<16x32xf32>
    %54 = vector.extract_strided_slice %37 {offsets = [1, 0], sizes = [1, 32], strides = [1, 1]} : vector<4x32xf32> to vector<1x32xf32>
    %55 = vector.broadcast %54 : vector<1x32xf32> to vector<16x32xf32>
    %56 = arith.mulf %36, %55 : vector<16x32xf32>
    %57 = vector.extract_strided_slice %37 {offsets = [2, 0], sizes = [1, 32], strides = [1, 1]} : vector<4x32xf32> to vector<1x32xf32>
    %58 = vector.broadcast %57 : vector<1x32xf32> to vector<16x32xf32>
    %59 = arith.mulf %36, %58 : vector<16x32xf32>
    %60 = vector.extract_strided_slice %37 {offsets = [3, 0], sizes = [1, 32], strides = [1, 1]} : vector<4x32xf32> to vector<1x32xf32>
    %61 = vector.broadcast %60 : vector<1x32xf32> to vector<16x32xf32>
    %62 = arith.mulf %36, %61 : vector<16x32xf32>
    %63 = tpu.concatenate %53, %56, %59, %62 in 0 : vector<16x32xf32>, vector<16x32xf32>, vector<16x32xf32>, vector<16x32xf32> -> vector<64x32xf32>
    "tpu.trace_start"() <{level = 10 : i32, message = "nd,md->nm"}> : () -> ()
    %cst_12 = arith.constant dense<0.000000e+00> : vector<16x64xf32>
    %64 = tpu.matmul %34, %50, %cst_12 {dimension_numbers = #tpu.dot_dimension_numbers<[1], [1], [0], [0], [0, 0, 1, 0], [], []>} : vector<16x32xf32>, vector<64x32xf32>, vector<16x64xf32> -> vector<16x64xf32>
    "tpu.trace_stop"() : () -> ()
    %c0_13 = arith.constant 0 : index
    %c0_14 = arith.constant 0 : index
    %65 = vector.load %arg6[%c0_13, %c0_14] : memref<16x64xf32, #tpu.memory_space<vmem>>, vector<16x64xf32>
    %66 = arith.addf %64, %65 : vector<16x64xf32>
    %67 = vector.extract_strided_slice %66 {offsets = [0, 0], sizes = [16, 16], strides = [1, 1]} : vector<16x64xf32> to vector<16x16xf32>
    %cst_15 = arith.constant dense<0xFF800000> : vector<16xf32>
    %68 = vector.multi_reduction <maximumf>, %67, %cst_15 [1] : vector<16x16xf32> to vector<16xf32>
    %69 = vector.shape_cast %68 : vector<16xf32> to vector<16x1xf32>
    %70 = vector.broadcast %69 : vector<16x1xf32> to vector<16x16xf32>
    %71 = arith.subf %67, %70 : vector<16x16xf32>
    %72 = math.exp %71 : vector<16x16xf32>
    %cst_16 = arith.constant dense<0.000000e+00> : vector<16xf32>
    %73 = vector.multi_reduction <add>, %72, %cst_16 [1] : vector<16x16xf32> to vector<16xf32>
    %74 = vector.shape_cast %73 : vector<16xf32> to vector<16x1xf32>
    %75 = vector.broadcast %74 : vector<16x1xf32> to vector<16x16xf32>
    %76 = arith.divf %72, %75 : vector<16x16xf32>
    %77 = vector.extract_strided_slice %66 {offsets = [0, 16], sizes = [16, 16], strides = [1, 1]} : vector<16x64xf32> to vector<16x16xf32>
    %cst_17 = arith.constant dense<0xFF800000> : vector<16xf32>
    %78 = vector.multi_reduction <maximumf>, %77, %cst_17 [1] : vector<16x16xf32> to vector<16xf32>
    %79 = vector.shape_cast %78 : vector<16xf32> to vector<16x1xf32>
    %80 = vector.broadcast %79 : vector<16x1xf32> to vector<16x16xf32>
    %81 = arith.subf %77, %80 : vector<16x16xf32>
    %82 = math.exp %81 : vector<16x16xf32>
    %cst_18 = arith.constant dense<0.000000e+00> : vector<16xf32>
    %83 = vector.multi_reduction <add>, %82, %cst_18 [1] : vector<16x16xf32> to vector<16xf32>
    %84 = vector.shape_cast %83 : vector<16xf32> to vector<16x1xf32>
    %85 = vector.broadcast %84 : vector<16x1xf32> to vector<16x16xf32>
    %86 = arith.divf %82, %85 : vector<16x16xf32>
    %87 = vector.extract_strided_slice %66 {offsets = [0, 32], sizes = [16, 16], strides = [1, 1]} : vector<16x64xf32> to vector<16x16xf32>
    %cst_19 = arith.constant dense<0xFF800000> : vector<16xf32>
    %88 = vector.multi_reduction <maximumf>, %87, %cst_19 [1] : vector<16x16xf32> to vector<16xf32>
    %89 = vector.shape_cast %88 : vector<16xf32> to vector<16x1xf32>
    %90 = vector.broadcast %89 : vector<16x1xf32> to vector<16x16xf32>
    %91 = arith.subf %87, %90 : vector<16x16xf32>
    %92 = math.exp %91 : vector<16x16xf32>
    %cst_20 = arith.constant dense<0.000000e+00> : vector<16xf32>
    %93 = vector.multi_reduction <add>, %92, %cst_20 [1] : vector<16x16xf32> to vector<16xf32>
    %94 = vector.shape_cast %93 : vector<16xf32> to vector<16x1xf32>
    %95 = vector.broadcast %94 : vector<16x1xf32> to vector<16x16xf32>
    %96 = arith.divf %92, %95 : vector<16x16xf32>
    %97 = vector.extract_strided_slice %66 {offsets = [0, 48], sizes = [16, 16], strides = [1, 1]} : vector<16x64xf32> to vector<16x16xf32>
    %cst_21 = arith.constant dense<0xFF800000> : vector<16xf32>
    %98 = vector.multi_reduction <maximumf>, %97, %cst_21 [1] : vector<16x16xf32> to vector<16xf32>
    %99 = vector.shape_cast %98 : vector<16xf32> to vector<16x1xf32>
    %100 = vector.broadcast %99 : vector<16x1xf32> to vector<16x16xf32>
    %101 = arith.subf %97, %100 : vector<16x16xf32>
    %102 = math.exp %101 : vector<16x16xf32>
    %cst_22 = arith.constant dense<0.000000e+00> : vector<16xf32>
    %103 = vector.multi_reduction <add>, %102, %cst_22 [1] : vector<16x16xf32> to vector<16xf32>
    %104 = vector.shape_cast %103 : vector<16xf32> to vector<16x1xf32>
    %105 = vector.broadcast %104 : vector<16x1xf32> to vector<16x16xf32>
    %106 = arith.divf %102, %105 : vector<16x16xf32>
    %107 = tpu.concatenate %76, %86, %96, %106 in 1 : vector<16x16xf32>, vector<16x16xf32>, vector<16x16xf32>, vector<16x16xf32> -> vector<16x64xf32>
    %cst_23 = arith.constant dense<0.000000e+00> : vector<16x32xf32>
    %108 = tpu.matmul %107, %63, %cst_23 {dimension_numbers = #tpu.dot_dimension_numbers<[1], [0], [0], [1], [0, 0, 1, 1], [], []>} : vector<16x64xf32>, vector<64x32xf32>, vector<16x32xf32> -> vector<16x32xf32>
    %c0_24 = arith.constant 0 : index
    %c0_25 = arith.constant 0 : index
    %109 = vector.load %arg2[%c0_24, %c0_25] : memref<32x32xf32, #tpu.memory_space<vmem>>, vector<32x32xf32>
    %cst_26 = arith.constant dense<0.000000e+00> : vector<16x32xf32>
    %110 = tpu.matmul %108, %109, %cst_26 {dimension_numbers = #tpu.dot_dimension_numbers<[1], [0], [0], [1], [0, 0, 1, 1], [], []>} : vector<16x32xf32>, vector<32x32xf32>, vector<16x32xf32> -> vector<16x32xf32>
    %111 = vector.broadcast %3 : vector<1x32xf32> to vector<16x32xf32>
    %112 = arith.addf %110, %111 : vector<16x32xf32>
    %113 = arith.addf %29, %112 : vector<16x32xf32>
    %cst_27 = arith.constant dense<0.000000e+00> : vector<16xf32>
    %114 = vector.multi_reduction <add>, %113, %cst_27 [1] : vector<16x32xf32> to vector<16xf32>
    %115 = vector.shape_cast %114 : vector<16xf32> to vector<16x1xf32>
    %cst_28 = arith.constant 3.200000e+01 : f32
    %116 = vector.broadcast %cst_28 : f32 to vector<16x1xf32>
    %117 = arith.divf %115, %116 : vector<16x1xf32>
    %118 = vector.broadcast %117 : vector<16x1xf32> to vector<16x32xf32>
    %119 = arith.subf %113, %118 : vector<16x32xf32>
    %120 = arith.mulf %119, %119 : vector<16x32xf32>
    %cst_29 = arith.constant dense<0.000000e+00> : vector<16xf32>
    %121 = vector.multi_reduction <add>, %120, %cst_29 [1] : vector<16x32xf32> to vector<16xf32>
    %122 = vector.shape_cast %121 : vector<16xf32> to vector<16x1xf32>
    %cst_30 = arith.constant 3.200000e+01 : f32
    %123 = vector.broadcast %cst_30 : f32 to vector<16x1xf32>
    %124 = arith.divf %122, %123 : vector<16x1xf32>
    %125 = vector.broadcast %117 : vector<16x1xf32> to vector<16x32xf32>
    %126 = arith.subf %113, %125 : vector<16x32xf32>
    %cst_31 = arith.constant 9.99999974E-6 : f32
    %127 = vector.broadcast %cst_31 : f32 to vector<16x1xf32>
    %128 = arith.addf %124, %127 : vector<16x1xf32>
    %129 = math.rsqrt %128 : vector<16x1xf32>
    %130 = vector.broadcast %129 : vector<16x1xf32> to vector<16x32xf32>
    %131 = arith.mulf %126, %130 : vector<16x32xf32>
    %132 = vector.broadcast %6 : vector<1x32xf32> to vector<16x32xf32>
    %133 = arith.mulf %131, %132 : vector<16x32xf32>
    %134 = vector.broadcast %7 : vector<1x32xf32> to vector<16x32xf32>
    %135 = arith.addf %133, %134 : vector<16x32xf32>
    %c0_32 = arith.constant 0 : index
    %c0_33 = arith.constant 0 : index
    %136 = vector.load %arg3[%c0_32, %c0_33] : memref<32x64xf32, #tpu.memory_space<vmem>>, vector<32x64xf32>
    %cst_34 = arith.constant dense<0.000000e+00> : vector<16x64xf32>
    %137 = tpu.matmul %135, %136, %cst_34 {dimension_numbers = #tpu.dot_dimension_numbers<[1], [0], [0], [1], [0, 0, 1, 1], [], []>} : vector<16x32xf32>, vector<32x64xf32>, vector<16x64xf32> -> vector<16x64xf32>
    %138 = vector.broadcast %4 : vector<1x64xf32> to vector<16x64xf32>
    %139 = arith.addf %137, %138 : vector<16x64xf32>
    %cst_35 = arith.constant 0.000000e+00 : f32
    %140 = vector.broadcast %cst_35 : f32 to vector<16x64xf32>
    %141 = arith.maximumf %139, %140 : vector<16x64xf32>
    %142 = arith.mulf %141, %141 : vector<16x64xf32>
    %c0_36 = arith.constant 0 : index
    %c0_37 = arith.constant 0 : index
    %143 = vector.load %arg4[%c0_36, %c0_37] : memref<64x32xf32, #tpu.memory_space<vmem>>, vector<64x32xf32>
    %cst_38 = arith.constant dense<0.000000e+00> : vector<16x32xf32>
    %144 = tpu.matmul %142, %143, %cst_38 {dimension_numbers = #tpu.dot_dimension_numbers<[1], [0], [0], [1], [0, 0, 1, 1], [], []>} : vector<16x64xf32>, vector<64x32xf32>, vector<16x32xf32> -> vector<16x32xf32>
    %145 = vector.broadcast %5 : vector<1x32xf32> to vector<16x32xf32>
    %146 = arith.addf %144, %145 : vector<16x32xf32>
    %147 = arith.addf %135, %146 : vector<16x32xf32>
    %cst_39 = arith.constant dense<0.000000e+00> : vector<16xf32>
    %148 = vector.multi_reduction <add>, %147, %cst_39 [1] : vector<16x32xf32> to vector<16xf32>
    %149 = vector.shape_cast %148 : vector<16xf32> to vector<16x1xf32>
    %cst_40 = arith.constant 3.200000e+01 : f32
    %150 = vector.broadcast %cst_40 : f32 to vector<16x1xf32>
    %151 = arith.divf %149, %150 : vector<16x1xf32>
    %152 = vector.broadcast %151 : vector<16x1xf32> to vector<16x32xf32>
    %153 = arith.subf %147, %152 : vector<16x32xf32>
    %154 = arith.mulf %153, %153 : vector<16x32xf32>
    %cst_41 = arith.constant dense<0.000000e+00> : vector<16xf32>
    %155 = vector.multi_reduction <add>, %154, %cst_41 [1] : vector<16x32xf32> to vector<16xf32>
    %156 = vector.shape_cast %155 : vector<16xf32> to vector<16x1xf32>
    %cst_42 = arith.constant 3.200000e+01 : f32
    %157 = vector.broadcast %cst_42 : f32 to vector<16x1xf32>
    %158 = arith.divf %156, %157 : vector<16x1xf32>
    %159 = vector.broadcast %151 : vector<16x1xf32> to vector<16x32xf32>
    %160 = arith.subf %147, %159 : vector<16x32xf32>
    %cst_43 = arith.constant 9.99999974E-6 : f32
    %161 = vector.broadcast %cst_43 : f32 to vector<16x1xf32>
    %162 = arith.addf %158, %161 : vector<16x1xf32>
    %163 = math.rsqrt %162 : vector<16x1xf32>
    %164 = vector.broadcast %163 : vector<16x1xf32> to vector<16x32xf32>
    %165 = arith.mulf %160, %164 : vector<16x32xf32>
    %166 = vector.broadcast %6 : vector<1x32xf32> to vector<16x32xf32>
    %167 = arith.mulf %165, %166 : vector<16x32xf32>
    %168 = vector.broadcast %7 : vector<1x32xf32> to vector<16x32xf32>
    %169 = arith.addf %167, %168 : vector<16x32xf32>
    %c0_44 = arith.constant 0 : index
    %c0_45 = arith.constant 0 : index
    %170 = vector.load %arg8[%c0_44, %c0_45] : memref<16x32xf32, #tpu.memory_space<vmem>>, vector<16x32xf32>
    tpu.vector_store %arg8[%c0_44, %c0_45], %169 {strides = array<i32>} : memref<16x32xf32, #tpu.memory_space<vmem>>, vector<16x32xf32>,
    return
  }
}

</mosaic_0001>

<llo_original>
// kernel: transformer_encoder_layer.1
$region0: #{transformer_encoder_layer.1}
  #allocation0 [shape = 'u32[]', space=smem, size = 0x4, offset = 0x4, fixed_abs, tag = 'smem constant byte address 0x4 - core index']
  #allocation1 [shape = 'u32[144,128]{1,0:T(1,128)}', space=vmem, size = 0x12000, scoped, tag = 'internal scratch']
  %s0 = inlined_call_operand.vmem [shape: f32[16,32], index: 0, kind: input, shape index: {}]
  %s1 = inlined_call_operand.vmem [shape: f32[32,96], index: 1, kind: input, shape index: {}]
  %s2 = inlined_call_operand.vmem [shape: f32[32,32], index: 2, kind: input, shape index: {}]
  %s3 = inlined_call_operand.vmem [shape: f32[32,64], index: 3, kind: input, shape index: {}]
  %s4 = inlined_call_operand.vmem [shape: f32[64,32], index: 4, kind: input, shape index: {}]
  %s5 = inlined_call_operand.vmem [shape: f32[8,128], index: 5, kind: input, shape index: {}]
  %s6 = inlined_call_operand.vmem [shape: f32[16,64], index: 6, kind: input, shape index: {}]
  %s7 = inlined_call_operand.vmem [shape: f32[4,32], index: 7, kind: input, shape index: {}]
  %s8 = inlined_call_operand.hbm [shape: f32[16,32], index: 8, kind: output, shape index: {}]
  %s9 = sld [smem:[#allocation0]]
  $region42: #{transformer_encoder_layer.1} parent=0
    _
  %s11 = ssub.s32 1, %s9
  %s12 = scalar_select 0, %s11, %s9
  $region1: #{transformer_encoder_layer.1} parent=0
    #allocation2 [shape = 'u8[8192]{0}', space=vmem, size = 0x2000, scoped, tag = 'output window, operand 0, single buffered']
    #allocation3 [shape = 's32[1]{0}', space=sflag, size = 0x4, scoped, tag = 'scoped memory for transformer_encoder_layer.1']
    %13 = vsyncpa [#allocation3], 0
    // Predicated region
    $region2: #{transformer_encoder_layer.1} parent=1 // pred_check
      _
    $region3: #{transformer_encoder_layer.1} parent=1 // pred_check_branch
      %15 = sbr.rel (0) target = $region5
    $region4: #{transformer_encoder_layer.1} parent=1 // pred_region
      _
    $region5: #{transformer_encoder_layer.1} parent=1 // pred_fallthru
      _
    // Predicated region
    $region6: #{transformer_encoder_layer.1} parent=1 // pred_check
      _
    $region7: #{transformer_encoder_layer.1} parent=1 // pred_check_branch
      %17 = sbr.rel (0) target = $region9
    $region8: #{transformer_encoder_layer.1} parent=1 // pred_region
      _
    $region9: #{transformer_encoder_layer.1} parent=1 // pred_fallthru
      _
    // Predicated region
    $region10: #{transformer_encoder_layer.1} parent=1 // pred_check
      _
    $region11: #{transformer_encoder_layer.1} parent=1 // pred_check_branch
      %19 = sbr.rel (0) target = $region13
    $region12: #{transformer_encoder_layer.1} parent=1 // pred_region
      _
    $region13: #{transformer_encoder_layer.1} parent=1 // pred_fallthru
      _
    // Predicated region
    $region14: #{transformer_encoder_layer.1} parent=1 // pred_check
      _
    $region15: #{transformer_encoder_layer.1} parent=1 // pred_check_branch
      %21 = sbr.rel (0) target = $region17
    $region16: #{transformer_encoder_layer.1} parent=1 // pred_region
      _
    $region17: #{transformer_encoder_layer.1} parent=1 // pred_fallthru
      _
    // Predicated region
    $region18: #{transformer_encoder_layer.1} parent=1 // pred_check
      _
    $region19: #{transformer_encoder_layer.1} parent=1 // pred_check_branch
      %23 = sbr.rel (0) target = $region21
    $region20: #{transformer_encoder_layer.1} parent=1 // pred_region
      _
    $region21: #{transformer_encoder_layer.1} parent=1 // pred_fallthru
      _
    // Predicated region
    $region22: #{transformer_encoder_layer.1} parent=1 // pred_check
      _
    $region23: #{transformer_encoder_layer.1} parent=1 // pred_check_branch
      %25 = sbr.rel (0) target = $region25
    $region24: #{transformer_encoder_layer.1} parent=1 // pred_region
      _
    $region25: #{transformer_encoder_layer.1} parent=1 // pred_fallthru
      _
    // Predicated region
    $region26: #{transformer_encoder_layer.1} parent=1 // pred_check
      _
    $region27: #{transformer_encoder_layer.1} parent=1 // pred_check_branch
      %27 = sbr.rel (0) target = $region29
    $region28: #{transformer_encoder_layer.1} parent=1 // pred_region
      _
    $region29: #{transformer_encoder_layer.1} parent=1 // pred_fallthru
      _
    // Predicated region
    $region30: #{transformer_encoder_layer.1} parent=1 // pred_check
      _
    $region31: #{transformer_encoder_layer.1} parent=1 // pred_check_branch
      %29 = sbr.rel (0) target = $region33
    $region32: #{transformer_encoder_layer.1} parent=1 // pred_region
      _
    $region33: #{transformer_encoder_layer.1} parent=1 // pred_fallthru
      _
    %v30 = vld [vmem:[%s0] sm:$0xff]
    %v31 = vld [vmem:[%s0 + $0x8] sm:$0xff]
    %v32 = vld [vmem:[%s5] sm:$0xff]
    %vm33 = vcmask 261120
    %v34 = vsel %vm33, %v30, 0.0
    %35 = vadd.xlane.f32.xlu0 %v34
    %v36 = vpop.xlane.xlu0 %35
    %v37 = vsel %vm33, %v31, 0.0
    %38 = vadd.xlane.f32.xlu0 %v37
    %v39 = vpop.xlane.xlu0 %38
    %v40 = vrcp.pop 32.0
    %v41 = vmul.f32 %v36, %v40
    %v42 = vmul.f32 %v39, %v40
    %v43 = vsub.f32 %v30, %v41
    %v44 = vsub.f32 %v31, %v42
    %v45 = vmul.f32 %v43, %v43
    %v46 = vmul.f32 %v44, %v44
    %v47 = vsel %vm33, %v45, 0.0
    %48 = vadd.xlane.f32.xlu0 %v47
    %v49 = vpop.xlane.xlu0 %48
    %v50 = vsel %vm33, %v46, 0.0
    %51 = vadd.xlane.f32.xlu0 %v50
    %v52 = vpop.xlane.xlu0 %51
    %v53 = vmul.f32 %v49, %v40
    %v54 = vmul.f32 %v52, %v40
    %v55 = vadd.f32 %v53, 1e-05
    %v56 = vadd.f32 %v54, 1e-05
    %v57 = vrsqrt.pop %v55
    %v58 = vrsqrt.pop %v56
    %v59 = vmul.f32 %v43, %v57
    %v60 = vmul.f32 %v44, %v58
    %v61 = vlaneseq
    %v62 = vshrl.u32 %v61, 7
    %v63 = vsub.s32 4, %v62
    %v64 = vrot.slane %v32, %v63
    %v65 = vmul.f32 %v59, %v64
    %v66 = vmul.f32 %v60, %v64
    %v67 = vlaneseq
    %v68 = vshrl.u32 %v67, 7
    %v69 = vsub.s32 5, %v68
    %v70 = vrot.slane %v32, %v69
    %v71 = vadd.f32 %v65, %v70
    %v72 = vadd.f32 %v66, %v70
    %v73 = vld [vmem:[%s1] sm:$0xff]
    %v74 = vld [vmem:[%s1 + $0x8] sm:$0xff]
    %v75 = vld [vmem:[%s1 + $0x10] sm:$0xff]
    %v76 = vld [vmem:[%s1 + $0x18] sm:$0xff]
    %v77 = vlaneseq
    %v78 = vshrl.u32 %v77, 7
    %v79 = vsub.s32 0, %v78
    %v80 = vrot.slane %v32, %v79
    %v82 = vsel %vm33, %v71, 0
    %v85 = vsel %vm33, %v72, 0
    %87 = vmatprep.subr.mxu0 0.0
    %88 = vmatpush1.msra.mxu0 %v73
    %89 = vmatprep.subr.mxu0 0.0
    %90 = vmatpush1.msra.mxu0 %v74
    %91 = vmatprep.subr.mxu0 0.0
    %92 = vmatpush1.msra.mxu0 %v75
    %93 = vmatprep.subr.mxu0 0.0
    %94 = vmatpush1.msra.mxu0 %v76
    %95 = vmatprep.subr.mxu0 0.0
    %96 = vmatpush1.msra.mxu0 0.0
    %97 = vmatprep.subr.mxu0 0.0
    %98 = vmatpush1.msra.mxu0 0.0
    %99 = vmatprep.subr.mxu0 0.0
    %100 = vmatpush1.msra.mxu0 0.0
    %101 = vmatprep.subr.mxu0 0.0
    %102 = vmatpush1.msra.mxu0 0.0
    %103 = vmatprep.subr.mxu0 0.0
    %104 = vmatpush1.msra.mxu0 0.0
    %105 = vmatprep.subr.mxu0 0.0
    %106 = vmatpush1.msra.mxu0 0.0
    %107 = vmatprep.subr.mxu0 0.0
    %108 = vmatpush1.msra.mxu0 0.0
    %109 = vmatprep.subr.mxu0 0.0
    %110 = vmatpush1.msra.mxu0 0.0
    %111 = vmatprep.subr.mxu0 0.0
    %112 = vmatpush1.msra.mxu0 0.0
    %113 = vmatprep.subr.mxu0 0.0
    %114 = vmatpush1.msra.mxu0 0.0
    %115 = vmatprep.subr.mxu0 0.0
    %116 = vmatpush1.msra.mxu0 0.0
    %117 = vmatprep.subr.mxu0 0.0
    %118 = vmatpush1.msra.mxu0 0.0
    %119 = vmatprep.subr.mxu0 0.0
    %120 = vmatpush1.msra.mxu0 0.0
    %121 = vmatprep.subr.mxu0 0.0
    %122 = vmatpush1.msra.mxu0 0.0
    %123 = vmatprep.subr.mxu0 0.0
    %124 = vmatpush1.msra.mxu0 0.0
    %125 = vmatprep.subr.mxu0 0.0
    %126 = vmatpush1.msra.mxu0 0.0
    %127 = vmatprep.subr.mxu0 0.0
    %128 = vmatpush1.msra.mxu0 0.0
    %129 = vmatprep.subr.mxu0 0.0
    %130 = vmatpush1.msra.mxu0 0.0
    %131 = vmatprep.subr.mxu0 0.0
    %132 = vmatpush1.msra.mxu0 0.0
    %133 = vmatprep.subr.mxu0 0.0
    %134 = vmatpush1.msra.mxu0 0.0
    %135 = vmatprep.subr.mxu0 0.0
    %136 = vmatpush1.msra.mxu0 0.0
    %137 = vmatprep.subr.mxu0 0.0
    %138 = vmatpush1.msra.mxu0 0.0
    %139 = vmatprep.subr.mxu0 0.0
    %140 = vmatpush1.msra.mxu0 0.0
    %141 = vmatprep.subr.mxu0 0.0
    %142 = vmatpush1.msra.mxu0 0.0
    %143 = vmatprep.subr.mxu0 0.0
    %144 = vmatpush1.msra.mxu0 0.0
    %145 = vmatprep.subr.mxu0 0.0
    %146 = vmatpush1.msra.mxu0 0.0
    %147 = vmatprep.subr.mxu0 0.0
    %148 = vmatpush1.msra.mxu0 0.0
    %149 = vmatprep.subr.mxu0 0.0
    %150 = vmatpush1.msra.mxu0 0.0
    %151 = vmatprep.mubr.f32.mxu0 0.0
    %152 = vmatmul.mubr.f32.gmra.mrb[0].mxu0 %v82
    %v153 = vpop.f32.mrb[0].mxu0
    %v154 = vadd.f32 %v80, %v153
    %v155 = vpop.f32.mrb[0].mxu0
    %156 = vmatprep.mubr.f32.mxu0 0.0
    %157 = vmatmul.mubr.f32.gmra.mrb[0].mxu0 %v85
    %v158 = vpop.f32.mrb[0].mxu0
    %v159 = vadd.f32 %v80, %v158
    %v160 = vpop.f32.mrb[0].mxu0
    %161 = vdwg.mxu0
    %v162 = vld [vmem:[%s7] sm:$0xf]
    %v163 = vlaneseq
    %v164 = vshrl.u32 %v163, 7
    %v165 = vsub.s32 0, %v164
    %v166 = vrot.slane %v162, %v165
    %168 = vrot.lane.b32.xlu0 %v166, 32
    %v169 = vpop.permute.xlu0 %168
    %v171 = vmul.f32 %v154, %v169
    %v172 = vmul.f32 %v159, %v169
    %v173 = vlaneseq
    %v174 = vshrl.u32 %v173, 7
    %v175 = vsub.s32 1, %v174
    %v176 = vrot.slane %v162, %v175
    %178 = vrot.lane.b32.xlu0 %v176, 32
    %v179 = vpop.permute.xlu0 %178
    %v181 = vmul.f32 %v154, %v179
    %v182 = vmul.f32 %v159, %v179
    %v183 = vlaneseq
    %v184 = vshrl.u32 %v183, 7
    %v185 = vsub.s32 2, %v184
    %v186 = vrot.slane %v162, %v185
    %188 = vrot.lane.b32.xlu0 %v186, 32
    %v189 = vpop.permute.xlu0 %188
    %v191 = vmul.f32 %v154, %v189
    %v192 = vmul.f32 %v159, %v189
    %v193 = vlaneseq
    %v194 = vshrl.u32 %v193, 7
    %v195 = vsub.s32 3, %v194
    %v196 = vrot.slane %v162, %v195
    %198 = vrot.lane.b32.xlu0 %v196, 32
    %v199 = vpop.permute.xlu0 %198
    %v201 = vmul.f32 %v154, %v199
    %v202 = vmul.f32 %v159, %v199
    %203 = vrot.lane.b32.xlu0 %v166, 64
    %v204 = vpop.permute.xlu0 %203
    %v206 = vmul.f32 %v154, %v204
    %v207 = vmul.f32 %v159, %v204
    %208 = vrot.lane.b32.xlu0 %v176, 64
    %v209 = vpop.permute.xlu0 %208
    %v211 = vmul.f32 %v154, %v209
    %v212 = vmul.f32 %v159, %v209
    %213 = vrot.lane.b32.xlu0 %v186, 64
    %v214 = vpop.permute.xlu0 %213
    %v216 = vmul.f32 %v154, %v214
    %v217 = vmul.f32 %v159, %v214
    %218 = vrot.lane.b32.xlu0 %v196, 64
    %v219 = vpop.permute.xlu0 %218
    %v221 = vmul.f32 %v154, %v219
    %v222 = vmul.f32 %v159, %v219
    %v223 = vld [vmem:[%s6] sm:$0xff]
    %v224 = vld [vmem:[%s6 + $0x8] sm:$0xff]
    %233 = vrot.lane.b32.xlu0 %v171, 96
    %v234 = vpop.permute.xlu0 %233
    %235 = vrot.lane.b32.xlu0 %v172, 96
    %v236 = vpop.permute.xlu0 %235
    %237 = vrot.lane.b32.xlu0 %v181, 96
    %v238 = vpop.permute.xlu0 %237
    %239 = vrot.lane.b32.xlu0 %v182, 96
    %v240 = vpop.permute.xlu0 %239
    %241 = vrot.lane.b32.xlu0 %v191, 96
    %v242 = vpop.permute.xlu0 %241
    %243 = vrot.lane.b32.xlu0 %v192, 96
    %v244 = vpop.permute.xlu0 %243
    %245 = vrot.lane.b32.xlu0 %v201, 96
    %v246 = vpop.permute.xlu0 %245
    %247 = vrot.lane.b32.xlu0 %v202, 96
    %v248 = vpop.permute.xlu0 %247
    %v250 = vsel %vm33, %v154, 0
    %v253 = vsel %vm33, %v159, 0
    %v255 = vsel %vm33, %v234, 0
    %v257 = vsel %vm33, %v236, 0
    %v259 = vsel %vm33, %v238, 0
    %v261 = vsel %vm33, %v240, 0
    %v263 = vsel %vm33, %v242, 0
    %v265 = vsel %vm33, %v244, 0
    %v267 = vsel %vm33, %v246, 0
    %v269 = vsel %vm33, %v248, 0
    %271 = vmatprep.subr.mxu0 0.0
    %272 = vmatpush1.xpose.msra.mxu0 %v255
    %273 = vmatprep.subr.mxu0 0.0
    %274 = vmatpush1.xpose.msra.mxu0 %v257
    %275 = vmatprep.subr.mxu0 0.0
    %276 = vmatpush1.xpose.msra.mxu0 %v259
    %277 = vmatprep.subr.mxu0 0.0
    %278 = vmatpush1.xpose.msra.mxu0 %v261
    %279 = vmatprep.subr.mxu0 0.0
    %280 = vmatpush1.xpose.msra.mxu0 %v263
    %281 = vmatprep.subr.mxu0 0.0
    %282 = vmatpush1.xpose.msra.mxu0 %v265
    %283 = vmatprep.subr.mxu0 0.0
    %284 = vmatpush1.xpose.msra.mxu0 %v267
    %285 = vmatprep.subr.mxu0 0.0
    %286 = vmatpush1.xpose.msra.mxu0 %v269
    %287 = vmatprep.subr.mxu0 0.0
    %288 = vmatpush1.xpose.msra.mxu0 0.0
    %289 = vmatprep.subr.mxu0 0.0
    %290 = vmatpush1.xpose.msra.mxu0 0.0
    %291 = vmatprep.subr.mxu0 0.0
    %292 = vmatpush1.xpose.msra.mxu0 0.0
    %293 = vmatprep.subr.mxu0 0.0
    %294 = vmatpush1.xpose.msra.mxu0 0.0
    %295 = vmatprep.subr.mxu0 0.0
    %296 = vmatpush1.xpose.msra.mxu0 0.0
    %297 = vmatprep.subr.mxu0 0.0
    %298 = vmatpush1.xpose.msra.mxu0 0.0
    %299 = vmatprep.subr.mxu0 0.0
    %300 = vmatpush1.xpose.msra.mxu0 0.0
    %301 = vmatprep.subr.mxu0 0.0
    %302 = vmatpush1.xpose.msra.mxu0 0.0
    %303 = vmatprep.subr.mxu0 0.0
    %304 = vmatpush1.xpose.msra.mxu0 0.0
    %305 = vmatprep.subr.mxu0 0.0
    %306 = vmatpush1.xpose.msra.mxu0 0.0
    %307 = vmatprep.subr.mxu0 0.0
    %308 = vmatpush1.xpose.msra.mxu0 0.0
    %309 = vmatprep.subr.mxu0 0.0
    %310 = vmatpush1.xpose.msra.mxu0 0.0
    %311 = vmatprep.subr.mxu0 0.0
    %312 = vmatpush1.xpose.msra.mxu0 0.0
    %313 = vmatprep.subr.mxu0 0.0
    %314 = vmatpush1.xpose.msra.mxu0 0.0
    %315 = vmatprep.subr.mxu0 0.0
    %316 = vmatpush1.xpose.msra.mxu0 0.0
    %317 = vmatprep.subr.mxu0 0.0
    %318 = vmatpush1.xpose.msra.mxu0 0.0
    %319 = vmatprep.subr.mxu0 0.0
    %320 = vmatpush1.xpose.msra.mxu0 0.0
    %321 = vmatprep.subr.mxu0 0.0
    %322 = vmatpush1.xpose.msra.mxu0 0.0
    %323 = vmatprep.subr.mxu0 0.0
    %324 = vmatpush1.xpose.msra.mxu0 0.0
    %325 = vmatprep.subr.mxu0 0.0
    %326 = vmatpush1.xpose.msra.mxu0 0.0
    %327 = vmatprep.subr.mxu0 0.0
    %328 = vmatpush1.xpose.msra.mxu0 0.0
    %329 = vmatprep.subr.mxu0 0.0
    %330 = vmatpush1.xpose.msra.mxu0 0.0
    %331 = vmatprep.subr.mxu0 0.0
    %332 = vmatpush1.xpose.msra.mxu0 0.0
    %333 = vmatprep.subr.mxu0 0.0
    %334 = vmatpush1.xpose.msra.mxu0 0.0
    %335 = vmatprep.mubr.f32.mxu0 0.0
    %336 = vmatmul.mubr.f32.gmra.mrb[0].mxu0 %v250
    %v337 = vpop.f32.mrb[0].mxu0
    %v338 = vadd.f32 %v223, %v337
    %v339 = vpop.f32.mrb[0].mxu0
    %340 = vmatprep.mubr.f32.mxu0 0.0
    %341 = vmatmul.mubr.f32.gmra.mrb[0].mxu0 %v253
    %v342 = vpop.f32.mrb[0].mxu0
    %v343 = vadd.f32 %v224, %v342
    %v344 = vpop.f32.mrb[0].mxu0
    %345 = vdwg.mxu0
    %vm346 = vcmask 130048
    %v347 = vsel %vm346, %v338, -inf
    %348 = vmax.xlane.f32.xlu0 %v347
    %v349 = vpop.xlane.xlu0 %348
    %v350 = vsel %vm346, %v343, -inf
    %351 = vmax.xlane.f32.xlu0 %v350
    %v352 = vpop.xlane.xlu0 %351
    %v353 = vsub.f32 %v338, %v349
    %v354 = vsub.f32 %v343, %v352
    %v355 = vmul.f32 %v353, 1.442695
    %v356 = vpow.pop %v355
    %v357 = vmul.f32 %v354, 1.442695
    %v358 = vpow.pop %v357
    %v359 = vsel %vm346, %v356, 0.0
    %360 = vadd.xlane.f32.xlu0 %v359
    %v361 = vpop.xlane.xlu0 %360
    %v362 = vsel %vm346, %v358, 0.0
    %363 = vadd.xlane.f32.xlu0 %v362
    %v364 = vpop.xlane.xlu0 %363
    %v365 = vrcp.pop %v361
    %v366 = vmul.f32 %v356, %v365
    %v367 = vrcp.pop %v364
    %v368 = vmul.f32 %v358, %v367
    %vm369 = vcmask 261248
    %v370 = vsel %vm369, %v338, -inf
    %371 = vmax.xlane.f32.xlu0 %v370
    %v372 = vpop.xlane.xlu0 %371
    %v373 = vsel %vm369, %v343, -inf
    %374 = vmax.xlane.f32.xlu0 %v373
    %v375 = vpop.xlane.xlu0 %374
    %v376 = vsub.f32 %v338, %v372
    %v377 = vsub.f32 %v343, %v375
    %v378 = vmul.f32 %v376, 1.442695
    %v379 = vpow.pop %v378
    %v380 = vmul.f32 %v377, 1.442695
    %v381 = vpow.pop %v380
    %384 = vrot.lane.b32.xlu0 %v379, 112
    %v385 = vpop.permute.xlu0 %384
    %386 = vrot.lane.b32.xlu0 %v381, 112
    %v387 = vpop.permute.xlu0 %386
    %v390 = vsel %vm346, %v385, 0.0
    %391 = vadd.xlane.f32.xlu0 %v390
    %v392 = vpop.xlane.xlu0 %391
    %v393 = vsel %vm346, %v387, 0.0
    %394 = vadd.xlane.f32.xlu0 %v393
    %v395 = vpop.xlane.xlu0 %394
    %v396 = vrcp.pop %v392
    %v397 = vmul.f32 %v379, %v396
    %v398 = vrcp.pop %v395
    %v399 = vmul.f32 %v381, %v398
    %vm400 = vcmask 392448
    %v401 = vsel %vm400, %v338, -inf
    %402 = vmax.xlane.f32.xlu0 %v401
    %v403 = vpop.xlane.xlu0 %402
    %v404 = vsel %vm400, %v343, -inf
    %405 = vmax.xlane.f32.xlu0 %v404
    %v406 = vpop.xlane.xlu0 %405
    %v407 = vsub.f32 %v338, %v403
    %v408 = vsub.f32 %v343, %v406
    %v409 = vmul.f32 %v407, 1.442695
    %v410 = vpow.pop %v409
    %v411 = vmul.f32 %v408, 1.442695
    %v412 = vpow.pop %v411
    %415 = vrot.lane.b32.xlu0 %v410, 96
    %v416 = vpop.permute.xlu0 %415
    %417 = vrot.lane.b32.xlu0 %v412, 96
    %v418 = vpop.permute.xlu0 %417
    %v421 = vsel %vm346, %v416, 0.0
    %422 = vadd.xlane.f32.xlu0 %v421
    %v423 = vpop.xlane.xlu0 %422
    %v424 = vsel %vm346, %v418, 0.0
    %425 = vadd.xlane.f32.xlu0 %v424
    %v426 = vpop.xlane.xlu0 %425
    %v427 = vrcp.pop %v423
    %v428 = vmul.f32 %v410, %v427
    %v429 = vrcp.pop %v426
    %v430 = vmul.f32 %v412, %v429
    %vm431 = vcmask 523648
    %v432 = vsel %vm431, %v338, -inf
    %433 = vmax.xlane.f32.xlu0 %v432
    %v434 = vpop.xlane.xlu0 %433
    %v435 = vsel %vm431, %v343, -inf
    %436 = vmax.xlane.f32.xlu0 %v435
    %v437 = vpop.xlane.xlu0 %436
    %v438 = vsub.f32 %v338, %v434
    %v439 = vsub.f32 %v343, %v437
    %v440 = vmul.f32 %v438, 1.442695
    %v441 = vpow.pop %v440
    %v442 = vmul.f32 %v439, 1.442695
    %v443 = vpow.pop %v442
    %446 = vrot.lane.b32.xlu0 %v441, 80
    %v447 = vpop.permute.xlu0 %446
    %448 = vrot.lane.b32.xlu0 %v443, 80
    %v449 = vpop.permute.xlu0 %448
    %v452 = vsel %vm346, %v447, 0.0
    %453 = vadd.xlane.f32.xlu0 %v452
    %v454 = vpop.xlane.xlu0 %453
    %v455 = vsel %vm346, %v449, 0.0
    %456 = vadd.xlane.f32.xlu0 %v455
    %v457 = vpop.xlane.xlu0 %456
    %v458 = vrcp.pop %v454
    %v459 = vmul.f32 %v441, %v458
    %v460 = vrcp.pop %v457
    %v461 = vmul.f32 %v443, %v460
    %v462 = vsel %vm346, %v366, %v397
    %v463 = vsel %vm346, %v368, %v399
    %v464 = vsel %vm33, %v462, %v428
    %v465 = vsel %vm33, %v463, %v430
    %vm466 = vcmask 392192
    %v467 = vsel %vm466, %v464, %v459
    %v468 = vsel %vm466, %v465, %v461
    %477 = vrot.lane.b32.xlu0 %v206, 64
    %v478 = vpop.permute.xlu0 %477
    %479 = vrot.lane.b32.xlu0 %v207, 64
    %v480 = vpop.permute.xlu0 %479
    %481 = vrot.lane.b32.xlu0 %v211, 64
    %v482 = vpop.permute.xlu0 %481
    %483 = vrot.lane.b32.xlu0 %v212, 64
    %v484 = vpop.permute.xlu0 %483
    %485 = vrot.lane.b32.xlu0 %v216, 64
    %v486 = vpop.permute.xlu0 %485
    %487 = vrot.lane.b32.xlu0 %v217, 64
    %v488 = vpop.permute.xlu0 %487
    %489 = vrot.lane.b32.xlu0 %v221, 64
    %v490 = vpop.permute.xlu0 %489
    %491 = vrot.lane.b32.xlu0 %v222, 64
    %v492 = vpop.permute.xlu0 %491
    %vm501 = vcmask 523264
    %v503 = vsel %vm501, %v467, 0
    %v506 = vsel %vm501, %v468, 0
    %508 = vmatprep.subr.mxu0 0.0
    %509 = vmatpush1.msra.mxu0 %v478
    %510 = vmatprep.subr.mxu0 0.0
    %511 = vmatpush1.msra.mxu0 %v480
    %512 = vmatprep.subr.mxu0 0.0
    %513 = vmatpush1.msra.mxu0 %v482
    %514 = vmatprep.subr.mxu0 0.0
    %515 = vmatpush1.msra.mxu0 %v484
    %516 = vmatprep.subr.mxu0 0.0
    %517 = vmatpush1.msra.mxu0 %v486
    %518 = vmatprep.subr.mxu0 0.0
    %519 = vmatpush1.msra.mxu0 %v488
    %520 = vmatprep.subr.mxu0 0.0
    %521 = vmatpush1.msra.mxu0 %v490
    %522 = vmatprep.subr.mxu0 0.0
    %523 = vmatpush1.msra.mxu0 %v492
    %524 = vmatprep.subr.mxu0 0.0
    %525 = vmatpush1.msra.mxu0 0.0
    %526 = vmatprep.subr.mxu0 0.0
    %527 = vmatpush1.msra.mxu0 0.0
    %528 = vmatprep.subr.mxu0 0.0
    %529 = vmatpush1.msra.mxu0 0.0
    %530 = vmatprep.subr.mxu0 0.0
    %531 = vmatpush1.msra.mxu0 0.0
    %532 = vmatprep.subr.mxu0 0.0
    %533 = vmatpush1.msra.mxu0 0.0
    %534 = vmatprep.subr.mxu0 0.0
    %535 = vmatpush1.msra.mxu0 0.0
    %536 = vmatprep.subr.mxu0 0.0
    %537 = vmatpush1.msra.mxu0 0.0
    %538 = vmatprep.subr.mxu0 0.0
    %539 = vmatpush1.msra.mxu0 0.0
    %540 = vmatprep.subr.mxu0 0.0
    %541 = vmatpush1.msra.mxu0 0.0
    %542 = vmatprep.subr.mxu0 0.0
    %543 = vmatpush1.msra.mxu0 0.0
    %544 = vmatprep.subr.mxu0 0.0
    %545 = vmatpush1.msra.mxu0 0.0
    %546 = vmatprep.subr.mxu0 0.0
    %547 = vmatpush1.msra.mxu0 0.0
    %548 = vmatprep.subr.mxu0 0.0
    %549 = vmatpush1.msra.mxu0 0.0
    %550 = vmatprep.subr.mxu0 0.0
    %551 = vmatpush1.msra.mxu0 0.0
    %552 = vmatprep.subr.mxu0 0.0
    %553 = vmatpush1.msra.mxu0 0.0
    %554 = vmatprep.subr.mxu0 0.0
    %555 = vmatpush1.msra.mxu0 0.0
    %556 = vmatprep.subr.mxu0 0.0
    %557 = vmatpush1.msra.mxu0 0.0
    %558 = vmatprep.subr.mxu0 0.0
    %559 = vmatpush1.msra.mxu0 0.0
    %560 = vmatprep.subr.mxu0 0.0
    %561 = vmatpush1.msra.mxu0 0.0
    %562 = vmatprep.subr.mxu0 0.0
    %563 = vmatpush1.msra.mxu0 0.0
    %564 = vmatprep.subr.mxu0 0.0
    %565 = vmatpush1.msra.mxu0 0.0
    %566 = vmatprep.subr.mxu0 0.0
    %567 = vmatpush1.msra.mxu0 0.0
    %568 = vmatprep.subr.mxu0 0.0
    %569 = vmatpush1.msra.mxu0 0.0
    %570 = vmatprep.subr.mxu0 0.0
    %571 = vmatpush1.msra.mxu0 0.0
    %572 = vmatprep.mubr.f32.mxu0 0.0
    %573 = vmatmul.mubr.f32.gmra.mrb[0].mxu0 %v503
    %v574 = vpop.f32.mrb[0].mxu0
    %v575 = vadd.f32 0.0, %v574
    %v576 = vpop.f32.mrb[0].mxu0
    %577 = vmatprep.mubr.f32.mxu0 0.0
    %578 = vmatmul.mubr.f32.gmra.mrb[0].mxu0 %v506
    %v579 = vpop.f32.mrb[0].mxu0
    %v580 = vadd.f32 0.0, %v579
    %v581 = vpop.f32.mrb[0].mxu0
    %582 = vdwg.mxu0
    %v583 = vld [vmem:[%s2] sm:$0xff]
    %v584 = vld [vmem:[%s2 + $0x8] sm:$0xff]
    %v585 = vld [vmem:[%s2 + $0x10] sm:$0xff]
    %v586 = vld [vmem:[%s2 + $0x18] sm:$0xff]
    %v587 = vlaneseq
    %v588 = vshrl.u32 %v587, 7
    %v589 = vsub.s32 1, %v588
    %v590 = vrot.slane %v32, %v589
    %v592 = vsel %vm33, %v575, 0
    %v595 = vsel %vm33, %v580, 0
    %597 = vmatprep.subr.mxu0 0.0
    %598 = vmatpush1.msra.mxu0 %v583
    %599 = vmatprep.subr.mxu0 0.0
    %600 = vmatpush1.msra.mxu0 %v584
    %601 = vmatprep.subr.mxu0 0.0
    %602 = vmatpush1.msra.mxu0 %v585
    %603 = vmatprep.subr.mxu0 0.0
    %604 = vmatpush1.msra.mxu0 %v586
    %605 = vmatprep.subr.mxu0 0.0
    %606 = vmatpush1.msra.mxu0 0.0
    %607 = vmatprep.subr.mxu0 0.0
    %608 = vmatpush1.msra.mxu0 0.0
    %609 = vmatprep.subr.mxu0 0.0
    %610 = vmatpush1.msra.mxu0 0.0
    %611 = vmatprep.subr.mxu0 0.0
    %612 = vmatpush1.msra.mxu0 0.0
    %613 = vmatprep.subr.mxu0 0.0
    %614 = vmatpush1.msra.mxu0 0.0
    %615 = vmatprep.subr.mxu0 0.0
    %616 = vmatpush1.msra.mxu0 0.0
    %617 = vmatprep.subr.mxu0 0.0
    %618 = vmatpush1.msra.mxu0 0.0
    %619 = vmatprep.subr.mxu0 0.0
    %620 = vmatpush1.msra.mxu0 0.0
    %621 = vmatprep.subr.mxu0 0.0
    %622 = vmatpush1.msra.mxu0 0.0
    %623 = vmatprep.subr.mxu0 0.0
    %624 = vmatpush1.msra.mxu0 0.0
    %625 = vmatprep.subr.mxu0 0.0
    %626 = vmatpush1.msra.mxu0 0.0
    %627 = vmatprep.subr.mxu0 0.0
    %628 = vmatpush1.msra.mxu0 0.0
    %629 = vmatprep.subr.mxu0 0.0
    %630 = vmatpush1.msra.mxu0 0.0
    %631 = vmatprep.subr.mxu0 0.0
    %632 = vmatpush1.msra.mxu0 0.0
    %633 = vmatprep.subr.mxu0 0.0
    %634 = vmatpush1.msra.mxu0 0.0
    %635 = vmatprep.subr.mxu0 0.0
    %636 = vmatpush1.msra.mxu0 0.0
    %637 = vmatprep.subr.mxu0 0.0
    %638 = vmatpush1.msra.mxu0 0.0
    %639 = vmatprep.subr.mxu0 0.0
    %640 = vmatpush1.msra.mxu0 0.0
    %641 = vmatprep.subr.mxu0 0.0
    %642 = vmatpush1.msra.mxu0 0.0
    %643 = vmatprep.subr.mxu0 0.0
    %644 = vmatpush1.msra.mxu0 0.0
    %645 = vmatprep.subr.mxu0 0.0
    %646 = vmatpush1.msra.mxu0 0.0
    %647 = vmatprep.subr.mxu0 0.0
    %648 = vmatpush1.msra.mxu0 0.0
    %649 = vmatprep.subr.mxu0 0.0
    %650 = vmatpush1.msra.mxu0 0.0
    %651 = vmatprep.subr.mxu0 0.0
    %652 = vmatpush1.msra.mxu0 0.0
    %653 = vmatprep.subr.mxu0 0.0
    %654 = vmatpush1.msra.mxu0 0.0
    %655 = vmatprep.subr.mxu0 0.0
    %656 = vmatpush1.msra.mxu0 0.0
    %657 = vmatprep.subr.mxu0 0.0
    %658 = vmatpush1.msra.mxu0 0.0
    %659 = vmatprep.subr.mxu0 0.0
    %660 = vmatpush1.msra.mxu0 0.0
    %661 = vmatprep.mubr.f32.mxu0 0.0
    %662 = vmatmul.mubr.f32.gmra.mrb[0].mxu0 %v592
    %v663 = vpop.f32.mrb[0].mxu0
    %v664 = vadd.f32 %v590, %v663
    %v665 = vpop.f32.mrb[0].mxu0
    %666 = vmatprep.mubr.f32.mxu0 0.0
    %667 = vmatmul.mubr.f32.gmra.mrb[0].mxu0 %v595
    %v668 = vpop.f32.mrb[0].mxu0
    %v669 = vadd.f32 %v590, %v668
    %v670 = vpop.f32.mrb[0].mxu0
    %671 = vdwg.mxu0
    %v672 = vadd.f32 %v71, %v664
    %v673 = vadd.f32 %v72, %v669
    %v674 = vsel %vm33, %v672, 0.0
    %675 = vadd.xlane.f32.xlu0 %v674
    %v676 = vpop.xlane.xlu0 %675
    %v677 = vsel %vm33, %v673, 0.0
    %678 = vadd.xlane.f32.xlu0 %v677
    %v679 = vpop.xlane.xlu0 %678
    %v680 = vmul.f32 %v676, %v40
    %v681 = vmul.f32 %v679, %v40
    %v682 = vsub.f32 %v672, %v680
    %v683 = vsub.f32 %v673, %v681
    %v684 = vmul.f32 %v682, %v682
    %v685 = vmul.f32 %v683, %v683
    %v686 = vsel %vm33, %v684, 0.0
    %687 = vadd.xlane.f32.xlu0 %v686
    %v688 = vpop.xlane.xlu0 %687
    %v689 = vsel %vm33, %v685, 0.0
    %690 = vadd.xlane.f32.xlu0 %v689
    %v691 = vpop.xlane.xlu0 %690
    %v692 = vmul.f32 %v688, %v40
    %v693 = vmul.f32 %v691, %v40
    %v694 = vadd.f32 %v692, 1e-05
    %v695 = vadd.f32 %v693, 1e-05
    %v696 = vrsqrt.pop %v694
    %v697 = vrsqrt.pop %v695
    %v698 = vmul.f32 %v682, %v696
    %v699 = vmul.f32 %v683, %v697
    %v700 = vmul.f32 %v698, %v64
    %v701 = vmul.f32 %v699, %v64
    %v702 = vadd.f32 %v700, %v70
    %v703 = vadd.f32 %v701, %v70
    %v704 = vld [vmem:[%s3] sm:$0xff]
    %v705 = vld [vmem:[%s3 + $0x8] sm:$0xff]
    %v706 = vld [vmem:[%s3 + $0x10] sm:$0xff]
    %v707 = vld [vmem:[%s3 + $0x18] sm:$0xff]
    %v708 = vlaneseq
    %v709 = vshrl.u32 %v708, 7
    %v710 = vsub.s32 2, %v709
    %v711 = vrot.slane %v32, %v710
    %v713 = vsel %vm33, %v702, 0
    %v716 = vsel %vm33, %v703, 0
    %718 = vmatprep.subr.mxu0 0.0
    %719 = vmatpush1.msra.mxu0 %v704
    %720 = vmatprep.subr.mxu0 0.0
    %721 = vmatpush1.msra.mxu0 %v705
    %722 = vmatprep.subr.mxu0 0.0
    %723 = vmatpush1.msra.mxu0 %v706
    %724 = vmatprep.subr.mxu0 0.0
    %725 = vmatpush1.msra.mxu0 %v707
    %726 = vmatprep.subr.mxu0 0.0
    %727 = vmatpush1.msra.mxu0 0.0
    %728 = vmatprep.subr.mxu0 0.0
    %729 = vmatpush1.msra.mxu0 0.0
    %730 = vmatprep.subr.mxu0 0.0
    %731 = vmatpush1.msra.mxu0 0.0
    %732 = vmatprep.subr.mxu0 0.0
    %733 = vmatpush1.msra.mxu0 0.0
    %734 = vmatprep.subr.mxu0 0.0
    %735 = vmatpush1.msra.mxu0 0.0
    %736 = vmatprep.subr.mxu0 0.0
    %737 = vmatpush1.msra.mxu0 0.0
    %738 = vmatprep.subr.mxu0 0.0
    %739 = vmatpush1.msra.mxu0 0.0
    %740 = vmatprep.subr.mxu0 0.0
    %741 = vmatpush1.msra.mxu0 0.0
    %742 = vmatprep.subr.mxu0 0.0
    %743 = vmatpush1.msra.mxu0 0.0
    %744 = vmatprep.subr.mxu0 0.0
    %745 = vmatpush1.msra.mxu0 0.0
    %746 = vmatprep.subr.mxu0 0.0
    %747 = vmatpush1.msra.mxu0 0.0
    %748 = vmatprep.subr.mxu0 0.0
    %749 = vmatpush1.msra.mxu0 0.0
    %750 = vmatprep.subr.mxu0 0.0
    %751 = vmatpush1.msra.mxu0 0.0
    %752 = vmatprep.subr.mxu0 0.0
    %753 = vmatpush1.msra.mxu0 0.0
    %754 = vmatprep.subr.mxu0 0.0
    %755 = vmatpush1.msra.mxu0 0.0
    %756 = vmatprep.subr.mxu0 0.0
    %757 = vmatpush1.msra.mxu0 0.0
    %758 = vmatprep.subr.mxu0 0.0
    %759 = vmatpush1.msra.mxu0 0.0
    %760 = vmatprep.subr.mxu0 0.0
    %761 = vmatpush1.msra.mxu0 0.0
    %762 = vmatprep.subr.mxu0 0.0
    %763 = vmatpush1.msra.mxu0 0.0
    %764 = vmatprep.subr.mxu0 0.0
    %765 = vmatpush1.msra.mxu0 0.0
    %766 = vmatprep.subr.mxu0 0.0
    %767 = vmatpush1.msra.mxu0 0.0
    %768 = vmatprep.subr.mxu0 0.0
    %769 = vmatpush1.msra.mxu0 0.0
    %770 = vmatprep.subr.mxu0 0.0
    %771 = vmatpush1.msra.mxu0 0.0
    %772 = vmatprep.subr.mxu0 0.0
    %773 = vmatpush1.msra.mxu0 0.0
    %774 = vmatprep.subr.mxu0 0.0
    %775 = vmatpush1.msra.mxu0 0.0
    %776 = vmatprep.subr.mxu0 0.0
    %777 = vmatpush1.msra.mxu0 0.0
    %778 = vmatprep.subr.mxu0 0.0
    %779 = vmatpush1.msra.mxu0 0.0
    %780 = vmatprep.subr.mxu0 0.0
    %781 = vmatpush1.msra.mxu0 0.0
    %782 = vmatprep.mubr.f32.mxu0 0.0
    %783 = vmatmul.mubr.f32.gmra.mrb[0].mxu0 %v713
    %v784 = vpop.f32.mrb[0].mxu0
    %v785 = vadd.f32 %v711, %v784
    %v786 = vpop.f32.mrb[0].mxu0
    %787 = vmatprep.mubr.f32.mxu0 0.0
    %788 = vmatmul.mubr.f32.gmra.mrb[0].mxu0 %v716
    %v789 = vpop.f32.mrb[0].mxu0
    %v790 = vadd.f32 %v711, %v789
    %v791 = vpop.f32.mrb[0].mxu0
    %792 = vdwg.mxu0
    %v793 = vmax.f32 %v785, 0.0
    %v794 = vmax.f32 %v790, 0.0
    %v795 = vmul.f32 %v793, %v793
    %v796 = vmul.f32 %v794, %v794
    %v797 = vld [vmem:[%s4] sm:$0xff]
    %v798 = vld [vmem:[%s4 + $0x8] sm:$0xff]
    %v799 = vld [vmem:[%s4 + $0x10] sm:$0xff]
    %v800 = vld [vmem:[%s4 + $0x18] sm:$0xff]
    %v801 = vld [vmem:[%s4 + $0x20] sm:$0xff]
    %v802 = vld [vmem:[%s4 + $0x28] sm:$0xff]
    %v803 = vld [vmem:[%s4 + $0x30] sm:$0xff]
    %v804 = vld [vmem:[%s4 + $0x38] sm:$0xff]
    %v805 = vlaneseq
    %v806 = vshrl.u32 %v805, 7
    %v807 = vsub.s32 3, %v806
    %v808 = vrot.slane %v32, %v807
    %v810 = vsel %vm501, %v795, 0
    %v813 = vsel %vm501, %v796, 0
    %815 = vmatprep.subr.mxu0 0.0
    %816 = vmatpush1.msra.mxu0 %v797
    %817 = vmatprep.subr.mxu0 0.0
    %818 = vmatpush1.msra.mxu0 %v798
    %819 = vmatprep.subr.mxu0 0.0
    %820 = vmatpush1.msra.mxu0 %v799
    %821 = vmatprep.subr.mxu0 0.0
    %822 = vmatpush1.msra.mxu0 %v800
    %823 = vmatprep.subr.mxu0 0.0
    %824 = vmatpush1.msra.mxu0 %v801
    %825 = vmatprep.subr.mxu0 0.0
    %826 = vmatpush1.msra.mxu0 %v802
    %827 = vmatprep.subr.mxu0 0.0
    %828 = vmatpush1.msra.mxu0 %v803
    %829 = vmatprep.subr.mxu0 0.0
    %830 = vmatpush1.msra.mxu0 %v804
    %831 = vmatprep.subr.mxu0 0.0
    %832 = vmatpush1.msra.mxu0 0.0
    %833 = vmatprep.subr.mxu0 0.0
    %834 = vmatpush1.msra.mxu0 0.0
    %835 = vmatprep.subr.mxu0 0.0
    %836 = vmatpush1.msra.mxu0 0.0
    %837 = vmatprep.subr.mxu0 0.0
    %838 = vmatpush1.msra.mxu0 0.0
    %839 = vmatprep.subr.mxu0 0.0
    %840 = vmatpush1.msra.mxu0 0.0
    %841 = vmatprep.subr.mxu0 0.0
    %842 = vmatpush1.msra.mxu0 0.0
    %843 = vmatprep.subr.mxu0 0.0
    %844 = vmatpush1.msra.mxu0 0.0
    %845 = vmatprep.subr.mxu0 0.0
    %846 = vmatpush1.msra.mxu0 0.0
    %847 = vmatprep.subr.mxu0 0.0
    %848 = vmatpush1.msra.mxu0 0.0
    %849 = vmatprep.subr.mxu0 0.0
    %850 = vmatpush1.msra.mxu0 0.0
    %851 = vmatprep.subr.mxu0 0.0
    %852 = vmatpush1.msra.mxu0 0.0
    %853 = vmatprep.subr.mxu0 0.0
    %854 = vmatpush1.msra.mxu0 0.0
    %855 = vmatprep.subr.mxu0 0.0
    %856 = vmatpush1.msra.mxu0 0.0
    %857 = vmatprep.subr.mxu0 0.0
    %858 = vmatpush1.msra.mxu0 0.0
    %859 = vmatprep.subr.mxu0 0.0
    %860 = vmatpush1.msra.mxu0 0.0
    %861 = vmatprep.subr.mxu0 0.0
    %862 = vmatpush1.msra.mxu0 0.0
    %863 = vmatprep.subr.mxu0 0.0
    %864 = vmatpush1.msra.mxu0 0.0
    %865 = vmatprep.subr.mxu0 0.0
    %866 = vmatpush1.msra.mxu0 0.0
    %867 = vmatprep.subr.mxu0 0.0
    %868 = vmatpush1.msra.mxu0 0.0
    %869 = vmatprep.subr.mxu0 0.0
    %870 = vmatpush1.msra.mxu0 0.0
    %871 = vmatprep.subr.mxu0 0.0
    %872 = vmatpush1.msra.mxu0 0.0
    %873 = vmatprep.subr.mxu0 0.0
    %874 = vmatpush1.msra.mxu0 0.0
    %875 = vmatprep.subr.mxu0 0.0
    %876 = vmatpush1.msra.mxu0 0.0
    %877 = vmatprep.subr.mxu0 0.0
    %878 = vmatpush1.msra.mxu0 0.0
    %879 = vmatprep.mubr.f32.mxu0 0.0
    %880 = vmatmul.mubr.f32.gmra.mrb[0].mxu0 %v810
    %v881 = vpop.f32.mrb[0].mxu0
    %v882 = vadd.f32 %v808, %v881
    %v883 = vpop.f32.mrb[0].mxu0
    %884 = vmatprep.mubr.f32.mxu0 0.0
    %885 = vmatmul.mubr.f32.gmra.mrb[0].mxu0 %v813
    %v886 = vpop.f32.mrb[0].mxu0
    %v887 = vadd.f32 %v808, %v886
    %v888 = vpop.f32.mrb[0].mxu0
    %889 = vdwg.mxu0
    %v890 = vadd.f32 %v702, %v882
    %v891 = vadd.f32 %v703, %v887
    %v892 = vsel %vm33, %v890, 0.0
    %893 = vadd.xlane.f32.xlu0 %v892
    %v894 = vpop.xlane.xlu0 %893
    %v895 = vsel %vm33, %v891, 0.0
    %896 = vadd.xlane.f32.xlu0 %v895
    %v897 = vpop.xlane.xlu0 %896
    %v898 = vmul.f32 %v894, %v40
    %v899 = vmul.f32 %v897, %v40
    %v900 = vsub.f32 %v890, %v898
    %v901 = vsub.f32 %v891, %v899
    %v902 = vmul.f32 %v900, %v900
    %v903 = vmul.f32 %v901, %v901
    %v904 = vsel %vm33, %v902, 0.0
    %905 = vadd.xlane.f32.xlu0 %v904
    %v906 = vpop.xlane.xlu0 %905
    %v907 = vsel %vm33, %v903, 0.0
    %908 = vadd.xlane.f32.xlu0 %v907
    %v909 = vpop.xlane.xlu0 %908
    %v910 = vmul.f32 %v906, %v40
    %v911 = vmul.f32 %v909, %v40
    %v912 = vadd.f32 %v910, 1e-05
    %v913 = vadd.f32 %v911, 1e-05
    %v914 = vrsqrt.pop %v912
    %v915 = vrsqrt.pop %v913
    %v916 = vmul.f32 %v900, %v914
    %v917 = vmul.f32 %v901, %v915
    %v918 = vmul.f32 %v916, %v64
    %v919 = vmul.f32 %v917, %v64
    %v920 = vadd.f32 %v918, %v70
    %v921 = vadd.f32 %v919, %v70
    %922 = vst.msk [vmem:[#allocation2] sm:$0xff] %vm33, %v920
    %923 = vst.msk [vmem:[#allocation2 + $0x8] sm:$0xff] %vm33, %v921
    // Predicated region
    $region34: #{transformer_encoder_layer.1} parent=1 // pred_check
      _
    $region35: #{transformer_encoder_layer.1} parent=1 // pred_check_branch
      %925 = sbr.rel (0) target = $region37
    $region36: #{transformer_encoder_layer.1} parent=1 // pred_region
      %s927 = ssub.s32 256, 256
      %928 = vsyncadd [#allocation3], %s927
      %s929 = sshll.u32 [#allocation2], 4
      %s930 = int_to_ptr.vmem [resolvable:$true] %s929
      %935 = dma.vmem_to_hbm [thread:$0]  %s930, 256, %s8, [#allocation3], 128, 128, 8
    $region37: #{transformer_encoder_layer.1} parent=1 // pred_fallthru
      _
    // Predicated region
    $region38: #{transformer_encoder_layer.1} parent=1 // pred_check
      _
    $region39: #{transformer_encoder_layer.1} parent=1 // pred_check_branch
      %937 = sbr.rel (0) target = $region41
    $region40: #{transformer_encoder_layer.1} parent=1 // pred_region
      %938 = dma.done [#allocation3], 256
    $region41: #{transformer_encoder_layer.1} parent=1 // pred_fallthru
      _
    %939 = vsyncpa [#allocation3], 1

</llo_original>
